<compile_context>
chip_gen: v5e
topology: v5e:2x2
jax: 0.10.0
libtpu: 0.0.40
codegen_flags: <defaults>
</compile_context>

<pallas_src>
import jax
import jax.numpy as jnp
from jax.experimental import pallas as pl
from jax.experimental.pallas import tpu as pltpu


def _round_up(n: int, m: int) -> int:
    return ((n + m - 1) // m) * m


def fold_params(params):
    """Collapse the 5 eval-mode Linear layers into one affine map.

    Weights are (in_features, out_features); biases are (1, out_features).
    Returns (W_eff, b_eff) with shapes (in_dim, 1) and (1, 1), float32.
    """
    hp = jax.lax.Precision.HIGHEST
    w = params["w1"].astype(jnp.float32)
    b = params["b1"].astype(jnp.float32)
    for i in (2, 3, 4, 5):
        wi = params[f"w{i}"].astype(jnp.float32)
        w = jnp.dot(w, wi, precision=hp)
        b = jnp.dot(b, wi, precision=hp) + params[f"b{i}"].astype(jnp.float32)
    return w, b


def _gemv_kernel(x_ref, w_ref, b_ref, o_ref):
    # x_ref: (tile_b, in_dim)          streamed from HBM (mem-bound stream)
    # w_ref: (in_dim, 128)             folded weight in column 0, zeros elsewhere
    # b_ref: (1, 1) in SMEM            folded bias scalar
    # o_ref: (tile_b, 1)
    y = jnp.dot(x_ref[...], w_ref[...], preferred_element_type=jnp.float32)
    o_ref[...] = (y[:, 0:1] + b_ref[0, 0]).astype(o_ref.dtype)


def _forward_impl(x, w_mat, b_eff, tb):
    B, in_dim = x.shape
    row_align = 16 if x.dtype == jnp.bfloat16 else 8

    # Big tile (amortize ~0.35us/step), but cap at ~half the batch so the grid
    # has >= 2 steps whenever possible (v7x: work for both TensorCores).
    tile_b = max(row_align, min(tb, _round_up(pl.cdiv(B, 2), row_align)))
    grid = (pl.cdiv(B, tile_b),)  # ragged last block; OOB rows masked on store

    return pl.pallas_call(
        _gemv_kernel,
        out_shape=jax.ShapeDtypeStruct((B, 1), jnp.float32),
        grid_spec=pltpu.PrefetchScalarGridSpec(
            num_scalar_prefetch=0,
            grid=grid,
            in_specs=[
                # x tile: full-extent feature dim -> no feature padding needed.
                pl.BlockSpec((tile_b, in_dim), lambda i: (i, 0)),
                # folded weight, lane-padded to 128 cols, constant block index.
                pl.BlockSpec((in_dim, 128), lambda i: (0, 0)),
                # folded bias scalar lives in SMEM (no padded VMEM tile).
                pl.BlockSpec(memory_space=pltpu.MemorySpace.SMEM),
            ],
            out_specs=pl.BlockSpec((tile_b, 1), lambda i: (i, 0)),
        ),
        compiler_params=pltpu.CompilerParams(
            dimension_semantics=("parallel",)),
    )(x, w_mat, b_eff)


def make_aesthetic_predictor(params, *, tb=1024):
    """Fold the 5 Linear layers ONCE and return a jitted forward(x) closure."""
    w_eff, b_eff = fold_params(params)                     # (in_dim, 1), (1, 1)
    in_dim = w_eff.shape[0]
    # Lane-pad the folded weight column to 128 so the in-kernel GEMV runs as a
    # single MXU matmul with a lane-aligned weight operand (done once, ~KBs).
    w_mat_f32 = jnp.pad(w_eff, ((0, 0), (0, 127)))         # (in_dim, 128)
    b_eff = b_eff.reshape(1, 1).astype(jnp.float32)

    @jax.jit
    def forward(x):
        # bf16 x (from the upstream CLIP encoder) is supported natively:
        # cast the tiny weight to bf16, keep f32 accumulation on the MXU.
        w = w_mat_f32.astype(jnp.bfloat16) if x.dtype == jnp.bfloat16 else w_mat_f32
        return _forward_impl(x, w, b_eff, tb)

    return forward


def init_params(key, input_size):
    """Deterministic synthetic params. Weight layout: (in_features, out_features)."""
    dims = [(input_size, 1024), (1024, 128), (128, 64), (64, 16), (16, 1)]
    params = {}
    for idx, (din, dout) in enumerate(dims, start=1):
        key, kw, kb = jax.random.split(key, 3)
        bound = 1.0 / (din ** 0.5)  # mimic nn.Linear uniform init bound
        params[f"w{idx}"] = jax.random.uniform(
            kw, (din, dout), jnp.float32, minval=-bound, maxval=bound)
        params[f"b{idx}"] = jax.random.uniform(
            kb, (1, dout), jnp.float32, minval=-bound, maxval=bound)
    return params


def reference_forward(x, params):
    """Un-folded pure-JAX reference: the literal 5-layer eval-mode forward."""
    hp = jax.lax.Precision.HIGHEST
    h = x.astype(jnp.float32)
    for i in (1, 2, 3, 4, 5):
        h = jnp.dot(h, params[f"w{i}"], precision=hp) + params[f"b{i}"]
    return h


if __name__ == "__main__":
    key = jax.random.PRNGKey(0)
    B, input_size = 16, 768  # CLIP ViT-L/14 embedding width; small batch

    key, kx, kp = jax.random.split(key, 3)
    x = jax.random.normal(kx, (B, input_size), jnp.float32)
    params = init_params(kp, input_size)

    ref = reference_forward(x, params)

    predictor = make_aesthetic_predictor(params)  # folds params exactly once

    # f32, batch multiple of the tile (grid of 2 steps -> both TCs on v7x).
    out = jax.block_until_ready(predictor(x))
    assert out.shape == (B, 1)
    assert jnp.allclose(out, ref, atol=5e-4, rtol=5e-4), "mismatch (f32)"

    # Ragged batch (no wrapper-side padding pass): last block is partial and
    # garbage tail rows are masked on store.
    x13 = x[:13]
    out13 = jax.block_until_ready(predictor(x13))
    assert out13.shape == (13, 1)
    assert jnp.allclose(out13, ref[:13], atol=5e-4, rtol=5e-4), "mismatch (ragged)"

    # bf16 input path (halves HBM traffic for the dominant x stream).
    xb = x.astype(jnp.bfloat16)
    out_b = jax.block_until_ready(predictor(xb))
    assert out_b.shape == (B, 1)
    assert jnp.allclose(out_b, ref, atol=1e-2, rtol=1e-1), "mismatch (bf16)"

    print("KERNEL_OK")
</pallas_src>

<mosaic_0001>
module attributes {stable_mosaic.version = 11 : i64} {
  func.func @_gemv_kernel(%arg0: i32, %arg1: memref<8x768xf32, #tpu.memory_space<vmem>>, %arg2: memref<768x128xf32, #tpu.memory_space<vmem>>, %arg3: memref<1x1xf32, #tpu.memory_space<smem>>, %arg4: memref<8x1xf32, #tpu.memory_space<vmem>>) attributes {dimension_semantics = [#tpu.dimension_semantics<parallel>], iteration_bounds = array<i64: 2>, scalar_prefetch = 0 : i64, scratch_operands = 0 : i64, tpu.core_type = #tpu.core_type<tc>, window_params = [{transform_indices = @transform_0, window_bounds = array<i64: 8, 768>}, {pipeline_mode = #tpu.pipeline_mode<synchronous>, transform_indices = @transform_1, window_bounds = array<i64: 768, 128>}, {transform_indices = @transform_2, window_bounds = array<i64: 1, 1>}, {transform_indices = @transform_3, window_bounds = array<i64: 8, 1>}]} {
    %c0 = arith.constant 0 : index
    %c0_0 = arith.constant 0 : index
    %0 = vector.load %arg1[%c0, %c0_0] : memref<8x768xf32, #tpu.memory_space<vmem>>, vector<8x768xf32>
    %c0_1 = arith.constant 0 : index
    %c0_2 = arith.constant 0 : index
    %1 = vector.load %arg2[%c0_1, %c0_2] : memref<768x128xf32, #tpu.memory_space<vmem>>, vector<768x128xf32>
    %cst = arith.constant dense<0.000000e+00> : vector<8x128xf32>
    %2 = tpu.matmul %0, %1, %cst {dimension_numbers = #tpu.dot_dimension_numbers<[1], [0], [0], [1], [0, 0, 1, 1], [], []>} : vector<8x768xf32>, vector<768x128xf32>, vector<8x128xf32> -> vector<8x128xf32>
    %3 = vector.extract_strided_slice %2 {offsets = [0, 0], sizes = [8, 1], strides = [1, 1]} : vector<8x128xf32> to vector<8x1xf32>
    %c0_3 = arith.constant 0 : index
    %c0_4 = arith.constant 0 : index
    %4 = memref.load %arg3[%c0_3, %c0_4] : memref<1x1xf32, #tpu.memory_space<smem>>
    %5 = vector.broadcast %4 : f32 to vector<8x1xf32>
    %6 = arith.addf %3, %5 : vector<8x1xf32>
    %c0_5 = arith.constant 0 : index
    %c0_6 = arith.constant 0 : index
    %7 = vector.load %arg4[%c0_5, %c0_6] : memref<8x1xf32, #tpu.memory_space<vmem>>, vector<8x1xf32>
    tpu.vector_store %arg4[%c0_5, %c0_6], %6 {strides = array<i32>} : memref<8x1xf32, #tpu.memory_space<vmem>>, vector<8x1xf32>,
    return
  }
  func.func @transform_0(%arg0: i32) -> (i32, i32) {
    %c0_i32 = arith.constant 0 : i32
    %c0_i32_0 = arith.constant 0 : i32
    return %arg0, %c0_i32 : i32, i32
  }
  func.func @transform_1(%arg0: i32) -> (i32, i32) {
    %c0_i32 = arith.constant 0 : i32
    %c0_i32_0 = arith.constant 0 : i32
    %c0_i32_1 = arith.constant 0 : i32
    return %c0_i32, %c0_i32_0 : i32, i32
  }
  func.func @transform_2(%arg0: i32) -> (i32, i32) {
    %c0_i32 = arith.constant 0 : i32
    %c0_i32_0 = arith.constant 0 : i32
    %c0_i32_1 = arith.constant 0 : i32
    return %c0_i32, %c0_i32_0 : i32, i32
  }
  func.func @transform_3(%arg0: i32) -> (i32, i32) {
    %c0_i32 = arith.constant 0 : i32
    %c0_i32_0 = arith.constant 0 : i32
    return %arg0, %c0_i32 : i32, i32
  }
}

</mosaic_0001>

<llo_original>
// kernel: forward.1
$region0: #{forward.1}
  #allocation0 [shape = 'u32[]', space=smem, size = 0x4, offset = 0x4, fixed_abs, tag = 'smem constant byte address 0x4 - core index']
  #allocation1 [shape = 'u32[72,128]{1,0:T(1,128)}', space=vmem, size = 0x9000, scoped, tag = 'internal scratch']
  #allocation2 [shape = 'f32[1,1]{1,0:T(1,128)S(6)}', space=smem, size = 0x200, scoped, tag = 'scoped memory for forward.1']
  %s0 = inlined_call_operand.hbm [shape: f32[16,768], index: 0, kind: input, shape index: {}]
  %s1 = inlined_call_operand.hbm [shape: f32[768,128], index: 1, kind: input, shape index: {}]
  %s2 = inlined_call_operand.<no memory space> [shape: f32[1,1], index: 2, kind: input, shape index: {}]
  %s3 = inlined_call_operand.vmem [shape: f32[16,1], index: 3, kind: output, shape index: {}]
  %s4 = sld [smem:[#allocation0]]
  $region53: #{forward.1} parent=0
    _
  %s6 = ssub.s32 1, %s4
  %s7 = scalar_select 0, %s6, %s4
  %8 = sst [smem:[#allocation2]] %s2
  $region1: #{forward.1} parent=0
    #allocation3 [shape = 'u8[49152]{0}', space=vmem, size = 0xc000, scoped, tag = 'input window, operand 0']
    #allocation4 [shape = 's32[2]{0}', space=sflag, size = 0x8, scoped, tag = 'scoped memory for forward.1']
    #allocation5 [shape = 'u8[393216]{0}', space=vmem, size = 0x60000, scoped, tag = 'input window, operand 1, single buffered']
    #allocation6 [shape = 's32[1]{0}', space=sflag, size = 0x4, scoped, tag = 'scoped memory for forward.1']
    %9 = vsyncpa [#allocation4], 0
    %s10 = scalar_lea.sflag [#allocation4], 1
    %11 = vsyncpa %s10, 0
    %12 = vsyncpa [#allocation6], 0
    loop: start=0, step=1, limit=4
    $region2: #{forward.1} parent=1 // loop_pre_header
      _
    $region3: #{forward.1} parent=1 // loop_header
      %s14 = sphi 0, %s18
      %p15 = scmp.ge.s32.totalorder %s14, 4
      %s24 = sphi 0, %s26
      %s27 = sphi 0, %s24
      %s28 = sphi 0, %s27
      %s44 = sphi 0, %s28
      %s48 = sphi 0, %s48
      %s50 = sphi 0, %s48
      %s51 = sphi 0, %s50
      %s65 = sphi 0, %s51
      %s69 = sphi 0, %s69
      %s71 = sphi 0, %s69
      %s72 = sphi 0, %s71
      %s86 = sphi 0, %s72
      %s92 = sphi 0, %s94
      %s95 = sphi 0, %s92
      %s96 = sphi 0, %s95
      %s112 = sphi 0, %s96
    $region4: #{forward.1} parent=1 // loop_header_branch
      %17 = sbr.rel (%p15) target = $region8
    $region5: #{forward.1} parent=1 // loop_body
      %s19 = ssub.s32 %s14, 1
      %s20 = ssub.s32 %s14, 2
      %s21 = sadd.s32 %s14, 1
      %s22 = ssub.s32 %s14, %s21
      %p23 = scmp.eq.s32.totalorder %s22, 0
      %s25 = sadd.s32 %s24, 1
      %s26 = scalar_select %p23, %s24, %s25
      %p29 = pneg %p23
      %p30 = scmp.eq.s32.totalorder %s14, 1
      %p31 = por %p29, %p30
      %p32 = scmp.ne.s32.totalorder %s24, %s27
      %p33 = scmp.eq.s32.totalorder %s14, 0
      %p34 = por %p32, %p33
      %p35 = scmp.ne.s32.totalorder %s24, %s27
      %p36 = scmp.eq.s32.totalorder %s19, 1
      %p37 = por %p35, %p36
      %p38 = scmp.ne.s32.totalorder %s27, %s28
      %p39 = scmp.eq.s32.totalorder %s19, 0
      %p40 = por %p38, %p39
      %p41 = scmp.ne.s32.totalorder %s27, %s28
      %p42 = scmp.eq.s32.totalorder %s20, 1
      %p43 = por %p41, %p42
      %p45 = scmp.ne.s32.totalorder %s28, %s44
      %p46 = scmp.eq.s32.totalorder %s20, 0
      %p47 = por %p45, %p46
      %s49 = sadd.s32 %s48, 1
      %p52 = scmp.eq.s32.totalorder %s14, 1
      %p53 = scmp.ne.s32.totalorder %s48, %s50
      %p54 = scmp.eq.s32.totalorder %s14, 0
      %p55 = por %p53, %p54
      %p56 = scmp.ne.s32.totalorder %s48, %s50
      %p57 = scmp.eq.s32.totalorder %s19, 1
      %p58 = por %p56, %p57
      %p59 = scmp.ne.s32.totalorder %s50, %s51
      %p60 = scmp.eq.s32.totalorder %s19, 0
      %p61 = por %p59, %p60
      %p62 = scmp.ne.s32.totalorder %s50, %s51
      %p63 = scmp.eq.s32.totalorder %s20, 1
      %p64 = por %p62, %p63
      %p66 = scmp.ne.s32.totalorder %s51, %s65
      %p67 = scmp.eq.s32.totalorder %s20, 0
      %p68 = por %p66, %p67
      %s70 = sadd.s32 %s69, 1
      %p73 = scmp.eq.s32.totalorder %s14, 1
      %p74 = scmp.ne.s32.totalorder %s69, %s71
      %p75 = scmp.eq.s32.totalorder %s14, 0
      %p76 = por %p74, %p75
      %p77 = scmp.ne.s32.totalorder %s69, %s71
      %p78 = scmp.eq.s32.totalorder %s19, 1
      %p79 = por %p77, %p78
      %p80 = scmp.ne.s32.totalorder %s71, %s72
      %p81 = scmp.eq.s32.totalorder %s19, 0
      %p82 = por %p80, %p81
      %p83 = scmp.ne.s32.totalorder %s71, %s72
      %p84 = scmp.eq.s32.totalorder %s20, 1
      %p85 = por %p83, %p84
      %p87 = scmp.ne.s32.totalorder %s72, %s86
      %p88 = scmp.eq.s32.totalorder %s20, 0
      %p89 = por %p87, %p88
      %s90 = ssub.s32 %s14, %s21
      %p91 = scmp.eq.s32.totalorder %s90, 0
      %s93 = sadd.s32 %s92, 1
      %s94 = scalar_select %p91, %s92, %s93
      %p97 = pneg %p91
      %p98 = scmp.eq.s32.totalorder %s14, 1
      %p99 = por %p97, %p98
      %p100 = scmp.ne.s32.totalorder %s92, %s95
      %p101 = scmp.eq.s32.totalorder %s14, 0
      %p102 = por %p100, %p101
      %p103 = scmp.ne.s32.totalorder %s92, %s95
      %p104 = scmp.eq.s32.totalorder %s19, 1
      %p105 = por %p103, %p104
      %p106 = scmp.ne.s32.totalorder %s95, %s96
      %p107 = scmp.eq.s32.totalorder %s19, 0
      %p108 = por %p106, %p107
      %p109 = scmp.ne.s32.totalorder %s95, %s96
      %p110 = scmp.eq.s32.totalorder %s20, 1
      %p111 = por %p109, %p110
      %p113 = scmp.ne.s32.totalorder %s96, %s112
      %p114 = scmp.eq.s32.totalorder %s20, 0
      %p115 = por %p113, %p114
      %p116 = scmp.le.s32.totalorder 1, %s14
      %p117 = scmp.lt.s32.totalorder %s14, 3
      %p118 = pnand %p116, %p117
      %p119 = pneg %p118
      // Predicated region
      $region9: #{forward.1} parent=5 // pred_check
        _
      $region10: #{forward.1} parent=5 // pred_check_branch
        %121 = sbr.rel (%p118) target = $region12
      $region11: #{forward.1} parent=5 // pred_region
        %s122 = ssub.s32 %s14, 1
        // Predicated region
        $region13: #{forward.1} parent=11 // pred_check
          %p123 = pneg %p61
        $region14: #{forward.1} parent=11 // pred_check_branch
          %125 = sbr.rel (%p123) target = $region16
        $region15: #{forward.1} parent=11 // pred_region
          %127 = vsyncadd [#allocation6], 0
          %s128 = sshll.u32 %s1, 4
          %s129 = int_to_ptr.hbm [resolvable:$true] %s128
          %s130 = sshll.u32 [#allocation5], 4
          %s131 = int_to_ptr.vmem [resolvable:$true] %s130
          %136 = dma.hbm_to_vmem [thread:$0]  %s129, 12288, %s131, [#allocation6], 128, 128, 8
        $region16: #{forward.1} parent=11 // pred_fallthru
          _
        // Predicated region
        $region17: #{forward.1} parent=11 // pred_check
          %p137 = pneg %p82
        $region18: #{forward.1} parent=11 // pred_check_branch
          %139 = sbr.rel (%p137) target = $region20
        $region19: #{forward.1} parent=11 // pred_region
          _
        $region20: #{forward.1} parent=11 // pred_fallthru
          _
      $region12: #{forward.1} parent=5 // pred_fallthru
        _
      %p140 = scmp.lt.s32.totalorder %s14, 2
      // Predicated region
      $region21: #{forward.1} parent=5 // pred_check
        %p141 = pneg %p140
      $region22: #{forward.1} parent=5 // pred_check_branch
        %143 = sbr.rel (%p141) target = $region24
      $region23: #{forward.1} parent=5 // pred_region
        // Predicated region
        $region25: #{forward.1} parent=23 // pred_check
          %p144 = pneg %p34
        $region26: #{forward.1} parent=23 // pred_check_branch
          %146 = sbr.rel (%p144) target = $region28
        $region27: #{forward.1} parent=23 // pred_region
          %s147 = sand.u32 %s24, 1
          %s148 = scalar_lea.sflag [#allocation4], %s147
          %s149 = sand.u32 %s24, 1
          %s150 = smul.addr %s149, 48
          %s151 = scalar_lea.vmem [#allocation3], %s150
          %153 = vsyncadd %s148, 0
          %s154 = smul.addr %s14, 6
          %s155 = smul.addr %s154, 8
          %s156 = scalar_lea.hbm %s0, %s155
          %s158 = sshll.u32 %s156, 4
          %s159 = int_to_ptr.hbm [resolvable:$true] %s158
          %s160 = sshll.u32 %s151, 4
          %s161 = int_to_ptr.vmem [resolvable:$true] %s160
          %163 = dma.hbm_to_vmem [thread:$0]  %s159, 768, %s161, %s148
        $region28: #{forward.1} parent=23 // pred_fallthru
          _
      $region24: #{forward.1} parent=5 // pred_fallthru
        _
      %p164 = scmp.le.s32.totalorder 1, %s14
      %p165 = scmp.lt.s32.totalorder %s14, 3
      %p166 = pnand %p164, %p165
      %p167 = pneg %p166
      // Predicated region
      $region29: #{forward.1} parent=5 // pred_check
        _
      $region30: #{forward.1} parent=5 // pred_check_branch
        %169 = sbr.rel (%p166) target = $region32
      $region31: #{forward.1} parent=5 // pred_region
        %s170 = ssub.s32 %s14, 1
        %s171 = sand.u32 %s27, 1
        %s172 = scalar_lea.sflag [#allocation4], %s171
        %s173 = sand.u32 %s27, 1
        %s174 = smul.addr %s173, 48
        %s175 = scalar_lea.vmem [#allocation3], %s174
        // Predicated region
        $region33: #{forward.1} parent=31 // pred_check
          %p176 = pneg %p40
        $region34: #{forward.1} parent=31 // pred_check_branch
          %178 = sbr.rel (%p176) target = $region36
        $region35: #{forward.1} parent=31 // pred_region
          %180 = dma.done %s172, 768
        $region36: #{forward.1} parent=31 // pred_fallthru
          _
        // Predicated region
        $region37: #{forward.1} parent=31 // pred_check
          %p181 = pneg %p61
        $region38: #{forward.1} parent=31 // pred_check_branch
          %183 = sbr.rel (%p181) target = $region40
        $region39: #{forward.1} parent=31 // pred_region
          %185 = dma.done [#allocation6], 12288
        $region40: #{forward.1} parent=31 // pred_fallthru
          _
        %s186 = sand.u32 %s27, 1
        %s187 = scalar_lea.sflag [#allocation4], %s186
        %s188 = sand.u32 %s27, 1
        %s189 = smul.addr %s188, 48
        %s190 = scalar_lea.vmem [#allocation3], %s189
        %p191 = pneg %p40
        %p192 = pneg %p37
        %p193 = pneg %p61
        %p194 = pneg %p58
        %p195 = pneg %p82
        %p196 = pneg %p79
        %p197 = pneg %p108
        %p198 = pneg %p105
        %p199 = scmp.lt.s32.totalorder %s19, 1
        %s200 = scalar_select %p199, %s19, 1
        %s201 = smul.addr %s200, 8
        %s202 = scalar_lea.vmem %s3, %s201
        %p203 = scmp.lt.s32.totalorder %s19, 1
        %s204 = scalar_select %p203, %s19, 1
        %s205 = smul.addr %s204, 8
        %s206 = scalar_lea.vmem %s3, %s205
        %v207 = vld [vmem:[%s175] sm:$0xff]
        %v208 = vld [vmem:[%s175 + $0x8] sm:$0xff]
        %v209 = vld [vmem:[%s175 + $0x10] sm:$0xff]
        %v210 = vld [vmem:[%s175 + $0x18] sm:$0xff]
        %v211 = vld [vmem:[%s175 + $0x20] sm:$0xff]
        %v212 = vld [vmem:[%s175 + $0x28] sm:$0xff]
        %v213 = vld [vmem:[#allocation5] sm:$0xff]
        %v214 = vld [vmem:[#allocation5 + $0x8] sm:$0xff]
        %v215 = vld [vmem:[#allocation5 + $0x10] sm:$0xff]
        %v216 = vld [vmem:[#allocation5 + $0x18] sm:$0xff]
        %v217 = vld [vmem:[#allocation5 + $0x20] sm:$0xff]
        %v218 = vld [vmem:[#allocation5 + $0x28] sm:$0xff]
        %v219 = vld [vmem:[#allocation5 + $0x30] sm:$0xff]
        %v220 = vld [vmem:[#allocation5 + $0x38] sm:$0xff]
        %v221 = vld [vmem:[#allocation5 + $0x40] sm:$0xff]
        %v222 = vld [vmem:[#allocation5 + $0x48] sm:$0xff]
        %v223 = vld [vmem:[#allocation5 + $0x50] sm:$0xff]
        %v224 = vld [vmem:[#allocation5 + $0x58] sm:$0xff]
        %v225 = vld [vmem:[#allocation5 + $0x60] sm:$0xff]
        %v226 = vld [vmem:[#allocation5 + $0x68] sm:$0xff]
        %v227 = vld [vmem:[#allocation5 + $0x70] sm:$0xff]
        %v228 = vld [vmem:[#allocation5 + $0x78] sm:$0xff]
        %v229 = vld [vmem:[#allocation5 + $0x80] sm:$0xff]
        %v230 = vld [vmem:[#allocation5 + $0x88] sm:$0xff]
        %v231 = vld [vmem:[#allocation5 + $0x90] sm:$0xff]
        %v232 = vld [vmem:[#allocation5 + $0x98] sm:$0xff]
        %v233 = vld [vmem:[#allocation5 + $0xa0] sm:$0xff]
        %v234 = vld [vmem:[#allocation5 + $0xa8] sm:$0xff]
        %v235 = vld [vmem:[#allocation5 + $0xb0] sm:$0xff]
        %v236 = vld [vmem:[#allocation5 + $0xb8] sm:$0xff]
        %v237 = vld [vmem:[#allocation5 + $0xc0] sm:$0xff]
        %v238 = vld [vmem:[#allocation5 + $0xc8] sm:$0xff]
        %v239 = vld [vmem:[#allocation5 + $0xd0] sm:$0xff]
        %v240 = vld [vmem:[#allocation5 + $0xd8] sm:$0xff]
        %v241 = vld [vmem:[#allocation5 + $0xe0] sm:$0xff]
        %v242 = vld [vmem:[#allocation5 + $0xe8] sm:$0xff]
        %v243 = vld [vmem:[#allocation5 + $0xf0] sm:$0xff]
        %v244 = vld [vmem:[#allocation5 + $0xf8] sm:$0xff]
        %v245 = vld [vmem:[#allocation5 + $0x100] sm:$0xff]
        %v246 = vld [vmem:[#allocation5 + $0x108] sm:$0xff]
        %v247 = vld [vmem:[#allocation5 + $0x110] sm:$0xff]
        %v248 = vld [vmem:[#allocation5 + $0x118] sm:$0xff]
        %v249 = vld [vmem:[#allocation5 + $0x120] sm:$0xff]
        %v250 = vld [vmem:[#allocation5 + $0x128] sm:$0xff]
        %v251 = vld [vmem:[#allocation5 + $0x130] sm:$0xff]
        %v252 = vld [vmem:[#allocation5 + $0x138] sm:$0xff]
        %v253 = vld [vmem:[#allocation5 + $0x140] sm:$0xff]
        %v254 = vld [vmem:[#allocation5 + $0x148] sm:$0xff]
        %v255 = vld [vmem:[#allocation5 + $0x150] sm:$0xff]
        %v256 = vld [vmem:[#allocation5 + $0x158] sm:$0xff]
        %v257 = vld [vmem:[#allocation5 + $0x160] sm:$0xff]
        %v258 = vld [vmem:[#allocation5 + $0x168] sm:$0xff]
        %v259 = vld [vmem:[#allocation5 + $0x170] sm:$0xff]
        %v260 = vld [vmem:[#allocation5 + $0x178] sm:$0xff]
        %v261 = vld [vmem:[#allocation5 + $0x180] sm:$0xff]
        %v262 = vld [vmem:[#allocation5 + $0x188] sm:$0xff]
        %v263 = vld [vmem:[#allocation5 + $0x190] sm:$0xff]
        %v264 = vld [vmem:[#allocation5 + $0x198] sm:$0xff]
        %v265 = vld [vmem:[#allocation5 + $0x1a0] sm:$0xff]
        %v266 = vld [vmem:[#allocation5 + $0x1a8] sm:$0xff]
        %v267 = vld [vmem:[#allocation5 + $0x1b0] sm:$0xff]
        %v268 = vld [vmem:[#allocation5 + $0x1b8] sm:$0xff]
        %v269 = vld [vmem:[#allocation5 + $0x1c0] sm:$0xff]
        %v270 = vld [vmem:[#allocation5 + $0x1c8] sm:$0xff]
        %v271 = vld [vmem:[#allocation5 + $0x1d0] sm:$0xff]
        %v272 = vld [vmem:[#allocation5 + $0x1d8] sm:$0xff]
        %v273 = vld [vmem:[#allocation5 + $0x1e0] sm:$0xff]
        %v274 = vld [vmem:[#allocation5 + $0x1e8] sm:$0xff]
        %v275 = vld [vmem:[#allocation5 + $0x1f0] sm:$0xff]
        %v276 = vld [vmem:[#allocation5 + $0x1f8] sm:$0xff]
        %v277 = vld [vmem:[#allocation5 + $0x200] sm:$0xff]
        %v278 = vld [vmem:[#allocation5 + $0x208] sm:$0xff]
        %v279 = vld [vmem:[#allocation5 + $0x210] sm:$0xff]
        %v280 = vld [vmem:[#allocation5 + $0x218] sm:$0xff]
        %v281 = vld [vmem:[#allocation5 + $0x220] sm:$0xff]
        %v282 = vld [vmem:[#allocation5 + $0x228] sm:$0xff]
        %v283 = vld [vmem:[#allocation5 + $0x230] sm:$0xff]
        %v284 = vld [vmem:[#allocation5 + $0x238] sm:$0xff]
        %v285 = vld [vmem:[#allocation5 + $0x240] sm:$0xff]
        %v286 = vld [vmem:[#allocation5 + $0x248] sm:$0xff]
        %v287 = vld [vmem:[#allocation5 + $0x250] sm:$0xff]
        %v288 = vld [vmem:[#allocation5 + $0x258] sm:$0xff]
        %v289 = vld [vmem:[#allocation5 + $0x260] sm:$0xff]
        %v290 = vld [vmem:[#allocation5 + $0x268] sm:$0xff]
        %v291 = vld [vmem:[#allocation5 + $0x270] sm:$0xff]
        %v292 = vld [vmem:[#allocation5 + $0x278] sm:$0xff]
        %v293 = vld [vmem:[#allocation5 + $0x280] sm:$0xff]
        %v294 = vld [vmem:[#allocation5 + $0x288] sm:$0xff]
        %v295 = vld [vmem:[#allocation5 + $0x290] sm:$0xff]
        %v296 = vld [vmem:[#allocation5 + $0x298] sm:$0xff]
        %v297 = vld [vmem:[#allocation5 + $0x2a0] sm:$0xff]
        %v298 = vld [vmem:[#allocation5 + $0x2a8] sm:$0xff]
        %v299 = vld [vmem:[#allocation5 + $0x2b0] sm:$0xff]
        %v300 = vld [vmem:[#allocation5 + $0x2b8] sm:$0xff]
        %v301 = vld [vmem:[#allocation5 + $0x2c0] sm:$0xff]
        %v302 = vld [vmem:[#allocation5 + $0x2c8] sm:$0xff]
        %v303 = vld [vmem:[#allocation5 + $0x2d0] sm:$0xff]
        %v304 = vld [vmem:[#allocation5 + $0x2d8] sm:$0xff]
        %v305 = vld [vmem:[#allocation5 + $0x2e0] sm:$0xff]
        %v306 = vld [vmem:[#allocation5 + $0x2e8] sm:$0xff]
        %v307 = vld [vmem:[#allocation5 + $0x2f0] sm:$0xff]
        %v308 = vld [vmem:[#allocation5 + $0x2f8] sm:$0xff]
        %309 = vmatpush.msra.mxu0 %v228
        %310 = vmatpush.msra.mxu0 %v227
        %311 = vmatpush.msra.mxu0 %v226
        %312 = vmatpush.msra.mxu0 %v225
        %313 = vmatpush.msra.mxu0 %v224
        %314 = vmatpush.msra.mxu0 %v223
        %315 = vmatpush.msra.mxu0 %v222
        %316 = vmatpush.msra.mxu0 %v221
        %317 = vmatpush.msra.mxu0 %v220
        %318 = vmatpush.msra.mxu0 %v219
        %319 = vmatpush.msra.mxu0 %v218
        %320 = vmatpush.msra.mxu0 %v217
        %321 = vmatpush.msra.mxu0 %v216
        %322 = vmatpush.msra.mxu0 %v215
        %323 = vmatpush.msra.mxu0 %v214
        %324 = vmatpush.msra.mxu0 %v213
        %325 = vmatmul.f32.gmra.mxu0 %v207
        %v326 = vpop.f32.mrf.mxu0
        %v327 = vadd.f32 0.0, %v326
        %328 = vdwg.mxu0
        %329 = vmatpush.msra.mxu0 %v244
        %330 = vmatpush.msra.mxu0 %v243
        %331 = vmatpush.msra.mxu0 %v242
        %332 = vmatpush.msra.mxu0 %v241
        %333 = vmatpush.msra.mxu0 %v240
        %334 = vmatpush.msra.mxu0 %v239
        %335 = vmatpush.msra.mxu0 %v238
        %336 = vmatpush.msra.mxu0 %v237
        %337 = vmatpush.msra.mxu0 %v236
        %338 = vmatpush.msra.mxu0 %v235
        %339 = vmatpush.msra.mxu0 %v234
        %340 = vmatpush.msra.mxu0 %v233
        %341 = vmatpush.msra.mxu0 %v232
        %342 = vmatpush.msra.mxu0 %v231
        %343 = vmatpush.msra.mxu0 %v230
        %344 = vmatpush.msra.mxu0 %v229
        %345 = vmatmul.f32.gmra.mxu0 %v208
        %v346 = vpop.f32.mrf.mxu0
        %v347 = vadd.f32 %v327, %v346
        %348 = vdwg.mxu0
        %349 = vmatpush.msra.mxu0 %v260
        %350 = vmatpush.msra.mxu0 %v259
        %351 = vmatpush.msra.mxu0 %v258
        %352 = vmatpush.msra.mxu0 %v257
        %353 = vmatpush.msra.mxu0 %v256
        %354 = vmatpush.msra.mxu0 %v255
        %355 = vmatpush.msra.mxu0 %v254
        %356 = vmatpush.msra.mxu0 %v253
        %357 = vmatpush.msra.mxu0 %v252
        %358 = vmatpush.msra.mxu0 %v251
        %359 = vmatpush.msra.mxu0 %v250
        %360 = vmatpush.msra.mxu0 %v249
        %361 = vmatpush.msra.mxu0 %v248
        %362 = vmatpush.msra.mxu0 %v247
        %363 = vmatpush.msra.mxu0 %v246
        %364 = vmatpush.msra.mxu0 %v245
        %365 = vmatmul.f32.gmra.mxu0 %v209
        %v366 = vpop.f32.mrf.mxu0
        %v367 = vadd.f32 %v347, %v366
        %368 = vdwg.mxu0
        %369 = vmatpush.msra.mxu0 %v276
        %370 = vmatpush.msra.mxu0 %v275
        %371 = vmatpush.msra.mxu0 %v274
        %372 = vmatpush.msra.mxu0 %v273
        %373 = vmatpush.msra.mxu0 %v272
        %374 = vmatpush.msra.mxu0 %v271
        %375 = vmatpush.msra.mxu0 %v270
        %376 = vmatpush.msra.mxu0 %v269
        %377 = vmatpush.msra.mxu0 %v268
        %378 = vmatpush.msra.mxu0 %v267
        %379 = vmatpush.msra.mxu0 %v266
        %380 = vmatpush.msra.mxu0 %v265
        %381 = vmatpush.msra.mxu0 %v264
        %382 = vmatpush.msra.mxu0 %v263
        %383 = vmatpush.msra.mxu0 %v262
        %384 = vmatpush.msra.mxu0 %v261
        %385 = vmatmul.f32.gmra.mxu0 %v210
        %v386 = vpop.f32.mrf.mxu0
        %v387 = vadd.f32 %v367, %v386
        %388 = vdwg.mxu0
        %389 = vmatpush.msra.mxu0 %v292
        %390 = vmatpush.msra.mxu0 %v291
        %391 = vmatpush.msra.mxu0 %v290
        %392 = vmatpush.msra.mxu0 %v289
        %393 = vmatpush.msra.mxu0 %v288
        %394 = vmatpush.msra.mxu0 %v287
        %395 = vmatpush.msra.mxu0 %v286
        %396 = vmatpush.msra.mxu0 %v285
        %397 = vmatpush.msra.mxu0 %v284
        %398 = vmatpush.msra.mxu0 %v283
        %399 = vmatpush.msra.mxu0 %v282
        %400 = vmatpush.msra.mxu0 %v281
        %401 = vmatpush.msra.mxu0 %v280
        %402 = vmatpush.msra.mxu0 %v279
        %403 = vmatpush.msra.mxu0 %v278
        %404 = vmatpush.msra.mxu0 %v277
        %405 = vmatmul.f32.gmra.mxu0 %v211
        %v406 = vpop.f32.mrf.mxu0
        %v407 = vadd.f32 %v387, %v406
        %408 = vdwg.mxu0
        %409 = vmatpush.msra.mxu0 %v308
        %410 = vmatpush.msra.mxu0 %v307
        %411 = vmatpush.msra.mxu0 %v306
        %412 = vmatpush.msra.mxu0 %v305
        %413 = vmatpush.msra.mxu0 %v304
        %414 = vmatpush.msra.mxu0 %v303
        %415 = vmatpush.msra.mxu0 %v302
        %416 = vmatpush.msra.mxu0 %v301
        %417 = vmatpush.msra.mxu0 %v300
        %418 = vmatpush.msra.mxu0 %v299
        %419 = vmatpush.msra.mxu0 %v298
        %420 = vmatpush.msra.mxu0 %v297
        %421 = vmatpush.msra.mxu0 %v296
        %422 = vmatpush.msra.mxu0 %v295
        %423 = vmatpush.msra.mxu0 %v294
        %424 = vmatpush.msra.mxu0 %v293
        %425 = vmatmul.f32.gmra.mxu0 %v212
        %v426 = vpop.f32.mrf.mxu0
        %v427 = vadd.f32 %v407, %v426
        %428 = vdwg.mxu0
        %s429 = sld [smem:[#allocation2]]
        %v430 = vstv %s429
        %v431 = vadd.f32 %v427, %v430
        %vm432 = vcmask 7168
        %433 = vst.msk [vmem:[%s206] sm:$0xff] %vm432, %v431
        %p434 = scmp.lt.s32.totalorder %s19, 1
        %s435 = scalar_select %p434, %s19, 1
        %s436 = smul.addr %s435, 8
        %s437 = scalar_lea.vmem %s3, %s436
        // Predicated region
        $region41: #{forward.1} parent=31 // pred_check
          %p438 = pneg %p105
        $region42: #{forward.1} parent=31 // pred_check_branch
          %440 = sbr.rel (%p438) target = $region44
        $region43: #{forward.1} parent=31 // pred_region
          _
        $region44: #{forward.1} parent=31 // pred_fallthru
          _
      $region32: #{forward.1} parent=5 // pred_fallthru
        _
      %p441 = scmp.le.s32.totalorder 2, %s14
      // Predicated region
      $region45: #{forward.1} parent=5 // pred_check
        %p442 = pneg %p441
      $region46: #{forward.1} parent=5 // pred_check_branch
        %444 = sbr.rel (%p442) target = $region48
      $region47: #{forward.1} parent=5 // pred_region
        %s445 = ssub.s32 %s14, 2
        // Predicated region
        $region49: #{forward.1} parent=47 // pred_check
          %p446 = pneg %p111
        $region50: #{forward.1} parent=47 // pred_check_branch
          %448 = sbr.rel (%p446) target = $region52
        $region51: #{forward.1} parent=47 // pred_region
          %p449 = scmp.lt.s32.totalorder %s20, 1
          %s450 = scalar_select %p449, %s20, 1
          %s451 = smul.addr %s450, 8
          %s452 = scalar_lea.vmem %s3, %s451
        $region52: #{forward.1} parent=47 // pred_fallthru
          _
      $region48: #{forward.1} parent=5 // pred_fallthru
        _
    $region6: #{forward.1} parent=1 // loop_footer
      %s18 = sadd.s32 1, %s14
    $region7: #{forward.1} parent=1 // loop_footer_branch
      %13 = sbr.rel target = $region3
    $region8: #{forward.1} parent=1 // loop_exit
      _
    %453 = vsyncpa [#allocation4], 1
    %s454 = scalar_lea.sflag [#allocation4], 1
    %455 = vsyncpa %s454, 1
    %456 = vsyncpa [#allocation6], 1

</llo_original>
